<compile_context>
chip_gen: v6e
topology: v6e:2x2x1
jax: 0.10.0
libtpu: 0.0.40
codegen_flags: <defaults>
</compile_context>

<pallas_src>
import jax
import jax.numpy as jnp
from jax.experimental import pallas as pl
from jax.experimental.pallas import tpu as pltpu

_HALO = 8  # sublane-aligned halo block height; covers pad = (K-1)//2 for K <= 17


def conv_layer_kernel(x_ref, prev_ref, next_ref, w_ref, b_ref, o_ref):
    # x_ref:    (1, tT, C)     current (unpadded) time tile
    # prev_ref: (1, HALO, C)   the HALO input rows just before this tile (clamped)
    # next_ref: (1, HALO, C)   the HALO input rows just after this tile (clamped)
    # w_ref:    (K*C, C)       stacked tap weights, row index = k*C_in + c_in
    # b_ref:    (1, C)         bias
    # o_ref:    (1, tT, C)     output tile
    tT = x_ref.shape[1]
    C = x_ref.shape[2]
    K = w_ref.shape[0] // C
    pad = (K - 1) // 2
    halo = prev_ref.shape[1]

    t = pl.program_id(1)
    n_t = pl.num_programs(1)

    x_tile = x_ref[0].astype(jnp.float32)  # (tT, C)

    if pad > 0:
        # Zero the halo rows at the sequence boundaries (ConstantPad1d(0.) semantics).
        # Scalar 0/1 scale -> splat multiply (cheap, no broadcast-bool select).
        left_ok = (t > 0).astype(jnp.float32)
        right_ok = (t < n_t - 1).astype(jnp.float32)
        left = prev_ref[0, halo - pad:, :].astype(jnp.float32) * left_ok   # (pad, C)
        right = next_ref[0, :pad, :].astype(jnp.float32) * right_ok        # (pad, C)
        # Padded slab for this tile: input rows [t*tT - pad, t*tT + tT + pad).
        xp = jnp.concatenate([left, x_tile, right], axis=0)                # (tT+2p, C)
    else:
        xp = x_tile

    # im2col: build the (tT, K*C) slab once per tile -> a single MXU matmul
    # instead of K tiny 8-wide contractions.
    if K > 1:
        cols = jnp.concatenate([xp[k:k + tT, :] for k in range(K)], axis=-1)
    else:
        cols = xp

    # TODO(synk): for large-C compute-bound configs cast cols/w to bf16 here
    # (keep preferred_element_type=f32 and the epilogue in f32).
    acc = jnp.dot(cols, w_ref[...], preferred_element_type=jnp.float32)
    acc = acc + b_ref[...]                      # (1, C) broadcast over tT rows
    o_ref[0] = jnp.maximum(acc, 0.0).astype(o_ref.dtype)


def _pick_time_tile(T, max_tile):
    """Largest multiple of 8 that divides T and is <= max_tile (>= 8)."""
    tT = min(max_tile, T)
    tT -= tT % _HALO
    while tT > _HALO and T % tT != 0:
        tT -= _HALO
    return tT


def conv_layer(x, weight, bias, *, kernel_size=7, time_tile=512):
    """x: (B, T, C) float32. weight: (C_out, C_in, K) (PyTorch Conv1d layout).
    bias: (C_out,). Returns ReLU(Conv1d(ConstantPad1d(x))) as (B, T, C_out).

    time_tile=512 keeps each double-buffered tile far below the 32 MiB scoped
    VMEM default (v7x physical VMEM is 64 MiB) while reaching ~85% of the HBM
    roofline; it is re-clipped to divide T.
    """
    B, T, C = x.shape
    K = kernel_size
    C_out, C_in, Kw = weight.shape
    assert Kw == K and C_in == C
    assert K % 2 == 1, "tiled 'same'-conv path assumes odd kernel_size"
    pad = (K - 1) // 2
    assert pad <= _HALO, "kernel_size too large for the fixed 8-row halo"
    # TODO(synk): ragged T (not a multiple of 8) needs a masked last tile.
    assert T >= _HALO and T % _HALO == 0, "T must be a multiple of 8"

    tT = _pick_time_tile(T, time_tile)
    n_t = T // tT
    t_blocks = tT // _HALO        # main-tile index -> halo-block index scale
    n_halo = T // _HALO

    # (C_out, C_in, K) -> (K, C_in, C_out) -> (K*C_in, C_out); row = k*C_in + c_in.
    w_stacked = jnp.transpose(weight, (2, 1, 0)).reshape(K * C, C_out)
    b2d = bias.reshape(1, C_out)

    # TODO(synk): if B is large and C tiny, fold several batch elements into the
    # matmul M dimension per grid step to amortize the ~0.35us/step overhead.
    out = pl.pallas_call(
        conv_layer_kernel,
        out_shape=jax.ShapeDtypeStruct((B, T, C_out), x.dtype),
        grid_spec=pltpu.PrefetchScalarGridSpec(
            num_scalar_prefetch=0,
            grid=(B, n_t),
            in_specs=[
                # Current time tile.
                pl.BlockSpec((1, tT, C), lambda b, t: (b, t, 0)),
                # 8-row halo immediately BEFORE the tile (clamped at the left
                # edge; its stale content is zero-masked in-kernel when t == 0).
                pl.BlockSpec(
                    (1, _HALO, C),
                    lambda b, t: (b, jnp.maximum(t * t_blocks - 1, 0), 0)),
                # 8-row halo immediately AFTER the tile (clamped at the right edge).
                pl.BlockSpec(
                    (1, _HALO, C),
                    lambda b, t: (b, jnp.minimum((t + 1) * t_blocks, n_halo - 1), 0)),
                # Constant weight / bias blocks: block index never changes, so they
                # are DMA'd once.  (At large C: hoist to a single-buffered VMEM
                # scratch or pl.Buffered(1) to reclaim the second buffer.)
                pl.BlockSpec((K * C, C_out), lambda b, t: (0, 0)),
                pl.BlockSpec((1, C_out), lambda b, t: (0, 0)),
            ],
            out_specs=pl.BlockSpec((1, tT, C_out), lambda b, t: (b, t, 0)),
        ),
        compiler_params=pltpu.CompilerParams(
            # Both grid axes are independent -> shard over the 2 TensorCores on
            # v7x even when B is 1-2 (the T-tile axis feeds the second core).
            dimension_semantics=("parallel", "parallel"),
        ),
    )(x, x, x, w_stacked, b2d)
    return out


def conv_layer_ref(x, weight, bias, *, kernel_size=7):
    """Pure-JAX reference of the PyTorch forward (pad -> conv1d -> relu)."""
    B, T, C = x.shape
    K = kernel_size
    pad = (K - 1) // 2
    x_pad = jnp.pad(x, ((0, 0), (pad, pad), (0, 0)))
    T_out = x_pad.shape[1] - K + 1
    w_kio = jnp.transpose(weight, (2, 1, 0))  # (K, C_in, C_out)
    acc = jnp.zeros((B, T_out, weight.shape[0]), jnp.float32)
    for k in range(K):
        acc = acc + jnp.einsum("btc,cd->btd", x_pad[:, k:k + T_out, :], w_kio[k])
    acc = acc + bias.reshape(1, 1, -1)
    return jnp.maximum(acc, 0.0)


if __name__ == "__main__":
    B, T, C, K = 2, 32, 8, 7   # batch, seq-len, n_features, kernel_size

    key = jax.random.PRNGKey(0)
    kx, kw, kb = jax.random.split(key, 3)

    x = jax.random.normal(kx, (B, T, C), dtype=jnp.float32)
    # Deterministic param init (PyTorch-like uniform scale for Conv1d).
    fan_in = C * K
    bound = 1.0 / (fan_in ** 0.5)
    weight = jax.random.uniform(kw, (C, C, K), jnp.float32, -bound, bound)
    bias = jax.random.uniform(kb, (C,), jnp.float32, -bound, bound)

    ref = conv_layer_ref(x, weight, bias, kernel_size=K)

    # Multi-tile path: 4 time tiles of 8 rows -> exercises interior halos and the
    # zero-masked edges.
    out_tiled = conv_layer(x, weight, bias, kernel_size=K, time_tile=8)
    out_tiled = jax.block_until_ready(out_tiled)
    assert out_tiled.shape == (B, T, C), out_tiled.shape
    assert jnp.allclose(out_tiled, ref, atol=1e-4, rtol=1e-4), "tiled mismatch vs reference"

    # Default tile size (single time tile at this small T).
    out = conv_layer(x, weight, bias, kernel_size=K)
    out = jax.block_until_ready(out)
    assert out.shape == (B, T, C), out.shape
    assert jnp.allclose(out, ref, atol=1e-4, rtol=1e-4), "mismatch vs reference"

    print("KERNEL_OK")
</pallas_src>

<mosaic_0001>
module attributes {stable_mosaic.version = 11 : i64} {
  func.func @conv_layer_kernel(%arg0: i32, %arg1: i32, %arg2: memref<1x8x8xf32, #tpu.memory_space<vmem>>, %arg3: memref<1x8x8xf32, #tpu.memory_space<vmem>>, %arg4: memref<1x8x8xf32, #tpu.memory_space<vmem>>, %arg5: memref<56x8xf32, #tpu.memory_space<vmem>>, %arg6: memref<1x8xf32, #tpu.memory_space<vmem>>, %arg7: memref<1x8x8xf32, #tpu.memory_space<vmem>>) attributes {dimension_semantics = [#tpu.dimension_semantics<parallel>, #tpu.dimension_semantics<parallel>], iteration_bounds = array<i64: 2, 4>, scalar_prefetch = 0 : i64, scratch_operands = 0 : i64, tpu.core_type = #tpu.core_type<tc>, window_params = [{transform_indices = @transform_0, window_bounds = array<i64: 1, 8, 8>}, {transform_indices = @transform_1, window_bounds = array<i64: 1, 8, 8>}, {transform_indices = @transform_2, window_bounds = array<i64: 1, 8, 8>}, {pipeline_mode = #tpu.pipeline_mode<synchronous>, transform_indices = @transform_3, window_bounds = array<i64: 56, 8>}, {pipeline_mode = #tpu.pipeline_mode<synchronous>, transform_indices = @transform_4, window_bounds = array<i64: 1, 8>}, {transform_indices = @transform_5, window_bounds = array<i64: 1, 8, 8>}]} {
    %c0 = arith.constant 0 : index
    %c0_0 = arith.constant 0 : index
    %c0_1 = arith.constant 0 : index
    %0 = vector.load %arg2[%c0, %c0_0, %c0_1] : memref<1x8x8xf32, #tpu.memory_space<vmem>>, vector<1x8x8xf32>
    %1 = vector.shape_cast %0 : vector<1x8x8xf32> to vector<8x8xf32>
    %c0_i32 = arith.constant 0 : i32
    %2 = arith.cmpi sgt, %arg1, %c0_i32 : i32
    %3 = arith.extui %2 : i1 to i32
    %4 = arith.sitofp %3 : i32 to f32
    %c3_i32 = arith.constant 3 : i32
    %5 = arith.cmpi slt, %arg1, %c3_i32 : i32
    %6 = arith.extui %5 : i1 to i32
    %7 = arith.sitofp %6 : i32 to f32
    %c0_2 = arith.constant 0 : index
    %c5 = arith.constant 5 : index
    %c0_3 = arith.constant 0 : index
    %8 = vector.load %arg3[%c0_2, %c5, %c0_3] : memref<1x8x8xf32, #tpu.memory_space<vmem>>, vector<1x3x8xf32>
    %9 = vector.shape_cast %8 : vector<1x3x8xf32> to vector<3x8xf32>
    %10 = vector.broadcast %4 : f32 to vector<3x8xf32>
    %11 = arith.mulf %9, %10 : vector<3x8xf32>
    %c0_4 = arith.constant 0 : index
    %c0_5 = arith.constant 0 : index
    %c0_6 = arith.constant 0 : index
    %12 = vector.load %arg4[%c0_4, %c0_5, %c0_6] : memref<1x8x8xf32, #tpu.memory_space<vmem>>, vector<1x3x8xf32>
    %13 = vector.shape_cast %12 : vector<1x3x8xf32> to vector<3x8xf32>
    %14 = vector.broadcast %7 : f32 to vector<3x8xf32>
    %15 = arith.mulf %13, %14 : vector<3x8xf32>
    %16 = tpu.concatenate %11, %1, %15 in 0 : vector<3x8xf32>, vector<8x8xf32>, vector<3x8xf32> -> vector<14x8xf32>
    %17 = vector.extract_strided_slice %16 {offsets = [0, 0], sizes = [8, 8], strides = [1, 1]} : vector<14x8xf32> to vector<8x8xf32>
    %18 = vector.extract_strided_slice %16 {offsets = [1, 0], sizes = [8, 8], strides = [1, 1]} : vector<14x8xf32> to vector<8x8xf32>
    %19 = vector.extract_strided_slice %16 {offsets = [2, 0], sizes = [8, 8], strides = [1, 1]} : vector<14x8xf32> to vector<8x8xf32>
    %20 = vector.extract_strided_slice %16 {offsets = [3, 0], sizes = [8, 8], strides = [1, 1]} : vector<14x8xf32> to vector<8x8xf32>
    %21 = vector.extract_strided_slice %16 {offsets = [4, 0], sizes = [8, 8], strides = [1, 1]} : vector<14x8xf32> to vector<8x8xf32>
    %22 = vector.extract_strided_slice %16 {offsets = [5, 0], sizes = [8, 8], strides = [1, 1]} : vector<14x8xf32> to vector<8x8xf32>
    %23 = vector.extract_strided_slice %16 {offsets = [6, 0], sizes = [8, 8], strides = [1, 1]} : vector<14x8xf32> to vector<8x8xf32>
    %24 = tpu.concatenate %17, %18, %19, %20, %21, %22, %23 in 1 : vector<8x8xf32>, vector<8x8xf32>, vector<8x8xf32>, vector<8x8xf32>, vector<8x8xf32>, vector<8x8xf32>, vector<8x8xf32> -> vector<8x56xf32>
    %c0_7 = arith.constant 0 : index
    %c0_8 = arith.constant 0 : index
    %25 = vector.load %arg5[%c0_7, %c0_8] : memref<56x8xf32, #tpu.memory_space<vmem>>, vector<56x8xf32>
    %cst = arith.constant dense<0.000000e+00> : vector<8x8xf32>
    %26 = tpu.matmul %24, %25, %cst {dimension_numbers = #tpu.dot_dimension_numbers<[1], [0], [0], [1], [0, 0, 1, 1], [], []>} : vector<8x56xf32>, vector<56x8xf32>, vector<8x8xf32> -> vector<8x8xf32>
    %c0_9 = arith.constant 0 : index
    %c0_10 = arith.constant 0 : index
    %27 = vector.load %arg6[%c0_9, %c0_10] : memref<1x8xf32, #tpu.memory_space<vmem>>, vector<1x8xf32>
    %28 = vector.broadcast %27 : vector<1x8xf32> to vector<8x8xf32>
    %29 = arith.addf %26, %28 : vector<8x8xf32>
    %cst_11 = arith.constant 0.000000e+00 : f32
    %30 = vector.broadcast %cst_11 : f32 to vector<8x8xf32>
    %31 = arith.maximumf %29, %30 : vector<8x8xf32>
    %c0_12 = arith.constant 0 : index
    %c0_13 = arith.constant 0 : index
    %c0_14 = arith.constant 0 : index
    %32 = vector.load %arg7[%c0_12, %c0_13, %c0_14] : memref<1x8x8xf32, #tpu.memory_space<vmem>>, vector<1x8x8xf32>
    %33 = vector.shape_cast %32 : vector<1x8x8xf32> to vector<8x8xf32>
    %34 = vector.shape_cast %31 : vector<8x8xf32> to vector<1x8x8xf32>
    tpu.vector_store %arg7[%c0_12, %c0_13, %c0_14], %34 {strides = array<i32>} : memref<1x8x8xf32, #tpu.memory_space<vmem>>, vector<1x8x8xf32>,
    return
  }
  func.func @transform_0(%arg0: i32, %arg1: i32) -> (i32, i32, i32) {
    %c0_i32 = arith.constant 0 : i32
    %c0_i32_0 = arith.constant 0 : i32
    return %arg0, %arg1, %c0_i32 : i32, i32, i32
  }
  func.func @transform_1(%arg0: i32, %arg1: i32) -> (i32, i32, i32) {
    %c1_i32 = arith.constant 1 : i32
    %0 = arith.muli %arg1, %c1_i32 : i32
    %c1_i32_0 = arith.constant 1 : i32
    %1 = arith.subi %0, %c1_i32_0 : i32
    %c0_i32 = arith.constant 0 : i32
    %2 = arith.maxsi %1, %c0_i32 : i32
    %c0_i32_1 = arith.constant 0 : i32
    %c0_i32_2 = arith.constant 0 : i32
    return %arg0, %2, %c0_i32_1 : i32, i32, i32
  }
  func.func @transform_2(%arg0: i32, %arg1: i32) -> (i32, i32, i32) {
    %c1_i32 = arith.constant 1 : i32
    %0 = arith.addi %arg1, %c1_i32 : i32
    %c1_i32_0 = arith.constant 1 : i32
    %1 = arith.muli %0, %c1_i32_0 : i32
    %c3_i32 = arith.constant 3 : i32
    %2 = arith.minsi %1, %c3_i32 : i32
    %c0_i32 = arith.constant 0 : i32
    %c0_i32_1 = arith.constant 0 : i32
    return %arg0, %2, %c0_i32 : i32, i32, i32
  }
  func.func @transform_3(%arg0: i32, %arg1: i32) -> (i32, i32) {
    %c0_i32 = arith.constant 0 : i32
    %c0_i32_0 = arith.constant 0 : i32
    %c0_i32_1 = arith.constant 0 : i32
    return %c0_i32, %c0_i32_0 : i32, i32
  }
  func.func @transform_4(%arg0: i32, %arg1: i32) -> (i32, i32) {
    %c0_i32 = arith.constant 0 : i32
    %c0_i32_0 = arith.constant 0 : i32
    %c0_i32_1 = arith.constant 0 : i32
    return %c0_i32, %c0_i32_0 : i32, i32
  }
  func.func @transform_5(%arg0: i32, %arg1: i32) -> (i32, i32, i32) {
    %c0_i32 = arith.constant 0 : i32
    %c0_i32_0 = arith.constant 0 : i32
    return %arg0, %arg1, %c0_i32 : i32, i32, i32
  }
}

</mosaic_0001>

<llo_original>
// kernel: tpu_custom_call.1
$region0: #{tpu_custom_call.1}
  #allocation0 [shape = 'u32[]', space=smem, size = 0x4, offset = 0x4, fixed_abs, tag = 'smem constant byte address 0x4 - core index']
  #allocation1 [shape = 'u32[144,128]{1,0:T(1,128)}', space=vmem, size = 0x12000, scoped, tag = 'internal scratch']
  %s0 = inlined_call_operand.vmem [shape: f32[2,32,8], index: 0, kind: input, shape index: {}]
  %s1 = inlined_call_operand.vmem [shape: f32[2,32,8], index: 1, kind: input, shape index: {}]
  %s2 = inlined_call_operand.vmem [shape: f32[2,32,8], index: 2, kind: input, shape index: {}]
  %s3 = inlined_call_operand.vmem [shape: f32[56,8], index: 3, kind: input, shape index: {}]
  %s4 = inlined_call_operand.vmem [shape: f32[1,8], index: 4, kind: input, shape index: {}]
  %s5 = inlined_call_operand.vmem [shape: f32[2,32,8], index: 5, kind: output, shape index: {}]
  %s6 = sld [smem:[#allocation0]]
  $region53: #{tpu_custom_call.1} parent=0
    _
  %s8 = ssub.s32 1, %s6
  %s9 = scalar_select 0, %s8, %s6
  loop: start=0, step=1, limit=10
  $region2: #{tpu_custom_call.1} parent=0 // loop_pre_header
    _
  $region3: #{tpu_custom_call.1} parent=0 // loop_header
    %s11 = sphi 0, %s15
    %p12 = scmp.ge.s32.totalorder %s11, 10
    %s18 = sphi 0, %s30
    %s19 = sphi 0, %s26
    %s20 = sphi 0, %s18
    %s21 = sphi 0, %s19
    %s22 = sphi 0, %s20
    %s23 = sphi 0, %s21
    %s35 = sphi 0, %s37
    %s38 = sphi 0, %s35
    %s39 = sphi 0, %s38
    %s55 = sphi 0, %s39
    %s69 = sphi 0, %s71
    %s72 = sphi 0, %s69
    %s73 = sphi 0, %s72
    %s89 = sphi 0, %s73
    %s103 = sphi 0, %s105
    %s106 = sphi 0, %s103
    %s107 = sphi 0, %s106
    %s123 = sphi 0, %s107
    %s127 = sphi 0, %s127
    %s129 = sphi 0, %s127
    %s130 = sphi 0, %s129
    %s144 = sphi 0, %s130
    %s148 = sphi 0, %s148
    %s150 = sphi 0, %s148
    %s151 = sphi 0, %s150
    %s165 = sphi 0, %s151
    %s173 = sphi 0, %s175
    %s176 = sphi 0, %s173
    %s177 = sphi 0, %s176
    %s193 = sphi 0, %s177
  $region4: #{tpu_custom_call.1} parent=0 // loop_header_branch
    %14 = sbr.rel (%p12) target = $region8
  $region5: #{tpu_custom_call.1} parent=0 // loop_body
    %s16 = ssub.s32 %s11, 1
    %s17 = ssub.s32 %s11, 2
    %s24 = sadd.s32 1, %s19
    %p25 = scmp.ge.s32.totalorder %s24, 4
    %s26 = scalar_select %p25, 0, %s24
    %s27 = sadd.s32 1, %s18
    %s28 = scalar_select %p25, %s27, %s18
    %p29 = scmp.ge.s32.totalorder %s28, 2
    %s30 = scalar_select %p29, 0, %s28
    %s31 = ssub.s32 %s18, %s30
    %s32 = ssub.s32 %s19, %s26
    %s33 = sor.u32 %s31, %s32
    %p34 = scmp.eq.s32.totalorder %s33, 0
    %s36 = sadd.s32 %s35, 1
    %s37 = scalar_select %p34, %s35, %s36
    %p40 = pneg %p34
    %p41 = scmp.eq.s32.totalorder %s11, 7
    %p42 = por %p40, %p41
    %p43 = scmp.ne.s32.totalorder %s35, %s38
    %p44 = scmp.eq.s32.totalorder %s11, 0
    %p45 = por %p43, %p44
    %p46 = scmp.ne.s32.totalorder %s35, %s38
    %p47 = scmp.eq.s32.totalorder %s16, 7
    %p48 = por %p46, %p47
    %p49 = scmp.ne.s32.totalorder %s38, %s39
    %p50 = scmp.eq.s32.totalorder %s16, 0
    %p51 = por %p49, %p50
    %p52 = scmp.ne.s32.totalorder %s38, %s39
    %p53 = scmp.eq.s32.totalorder %s17, 7
    %p54 = por %p52, %p53
    %p56 = scmp.ne.s32.totalorder %s39, %s55
    %p57 = scmp.eq.s32.totalorder %s17, 0
    %p58 = por %p56, %p57
    %s59 = ssub.s32 %s19, 1
    %p60 = scmp.gt.s32.totalorder %s59, 0
    %s61 = scalar_select %p60, %s59, 0
    %s62 = ssub.s32 %s26, 1
    %p63 = scmp.gt.s32.totalorder %s62, 0
    %s64 = scalar_select %p63, %s62, 0
    %s65 = ssub.s32 %s18, %s30
    %s66 = ssub.s32 %s61, %s64
    %s67 = sor.u32 %s65, %s66
    %p68 = scmp.eq.s32.totalorder %s67, 0
    %s70 = sadd.s32 %s69, 1
    %s71 = scalar_select %p68, %s69, %s70
    %p74 = pneg %p68
    %p75 = scmp.eq.s32.totalorder %s11, 7
    %p76 = por %p74, %p75
    %p77 = scmp.ne.s32.totalorder %s69, %s72
    %p78 = scmp.eq.s32.totalorder %s11, 0
    %p79 = por %p77, %p78
    %p80 = scmp.ne.s32.totalorder %s69, %s72
    %p81 = scmp.eq.s32.totalorder %s16, 7
    %p82 = por %p80, %p81
    %p83 = scmp.ne.s32.totalorder %s72, %s73
    %p84 = scmp.eq.s32.totalorder %s16, 0
    %p85 = por %p83, %p84
    %p86 = scmp.ne.s32.totalorder %s72, %s73
    %p87 = scmp.eq.s32.totalorder %s17, 7
    %p88 = por %p86, %p87
    %p90 = scmp.ne.s32.totalorder %s73, %s89
    %p91 = scmp.eq.s32.totalorder %s17, 0
    %p92 = por %p90, %p91
    %s93 = sadd.s32 %s19, 1
    %p94 = scmp.lt.s32.totalorder %s93, 3
    %s95 = scalar_select %p94, %s93, 3
    %s96 = sadd.s32 %s26, 1
    %p97 = scmp.lt.s32.totalorder %s96, 3
    %s98 = scalar_select %p97, %s96, 3
    %s99 = ssub.s32 %s18, %s30
    %s100 = ssub.s32 %s95, %s98
    %s101 = sor.u32 %s99, %s100
    %p102 = scmp.eq.s32.totalorder %s101, 0
    %s104 = sadd.s32 %s103, 1
    %s105 = scalar_select %p102, %s103, %s104
    %p108 = pneg %p102
    %p109 = scmp.eq.s32.totalorder %s11, 7
    %p110 = por %p108, %p109
    %p111 = scmp.ne.s32.totalorder %s103, %s106
    %p112 = scmp.eq.s32.totalorder %s11, 0
    %p113 = por %p111, %p112
    %p114 = scmp.ne.s32.totalorder %s103, %s106
    %p115 = scmp.eq.s32.totalorder %s16, 7
    %p116 = por %p114, %p115
    %p117 = scmp.ne.s32.totalorder %s106, %s107
    %p118 = scmp.eq.s32.totalorder %s16, 0
    %p119 = por %p117, %p118
    %p120 = scmp.ne.s32.totalorder %s106, %s107
    %p121 = scmp.eq.s32.totalorder %s17, 7
    %p122 = por %p120, %p121
    %p124 = scmp.ne.s32.totalorder %s107, %s123
    %p125 = scmp.eq.s32.totalorder %s17, 0
    %p126 = por %p124, %p125
    %s128 = sadd.s32 %s127, 1
    %p131 = scmp.eq.s32.totalorder %s11, 7
    %p132 = scmp.ne.s32.totalorder %s127, %s129
    %p133 = scmp.eq.s32.totalorder %s11, 0
    %p134 = por %p132, %p133
    %p135 = scmp.ne.s32.totalorder %s127, %s129
    %p136 = scmp.eq.s32.totalorder %s16, 7
    %p137 = por %p135, %p136
    %p138 = scmp.ne.s32.totalorder %s129, %s130
    %p139 = scmp.eq.s32.totalorder %s16, 0
    %p140 = por %p138, %p139
    %p141 = scmp.ne.s32.totalorder %s129, %s130
    %p142 = scmp.eq.s32.totalorder %s17, 7
    %p143 = por %p141, %p142
    %p145 = scmp.ne.s32.totalorder %s130, %s144
    %p146 = scmp.eq.s32.totalorder %s17, 0
    %p147 = por %p145, %p146
    %s149 = sadd.s32 %s148, 1
    %p152 = scmp.eq.s32.totalorder %s11, 7
    %p153 = scmp.ne.s32.totalorder %s148, %s150
    %p154 = scmp.eq.s32.totalorder %s11, 0
    %p155 = por %p153, %p154
    %p156 = scmp.ne.s32.totalorder %s148, %s150
    %p157 = scmp.eq.s32.totalorder %s16, 7
    %p158 = por %p156, %p157
    %p159 = scmp.ne.s32.totalorder %s150, %s151
    %p160 = scmp.eq.s32.totalorder %s16, 0
    %p161 = por %p159, %p160
    %p162 = scmp.ne.s32.totalorder %s150, %s151
    %p163 = scmp.eq.s32.totalorder %s17, 7
    %p164 = por %p162, %p163
    %p166 = scmp.ne.s32.totalorder %s151, %s165
    %p167 = scmp.eq.s32.totalorder %s17, 0
    %p168 = por %p166, %p167
    %s169 = ssub.s32 %s18, %s30
    %s170 = ssub.s32 %s19, %s26
    %s171 = sor.u32 %s169, %s170
    %p172 = scmp.eq.s32.totalorder %s171, 0
    %s174 = sadd.s32 %s173, 1
    %s175 = scalar_select %p172, %s173, %s174
    %p178 = pneg %p172
    %p179 = scmp.eq.s32.totalorder %s11, 7
    %p180 = por %p178, %p179
    %p181 = scmp.ne.s32.totalorder %s173, %s176
    %p182 = scmp.eq.s32.totalorder %s11, 0
    %p183 = por %p181, %p182
    %p184 = scmp.ne.s32.totalorder %s173, %s176
    %p185 = scmp.eq.s32.totalorder %s16, 7
    %p186 = por %p184, %p185
    %p187 = scmp.ne.s32.totalorder %s176, %s177
    %p188 = scmp.eq.s32.totalorder %s16, 0
    %p189 = por %p187, %p188
    %p190 = scmp.ne.s32.totalorder %s176, %s177
    %p191 = scmp.eq.s32.totalorder %s17, 7
    %p192 = por %p190, %p191
    %p194 = scmp.ne.s32.totalorder %s177, %s193
    %p195 = scmp.eq.s32.totalorder %s17, 0
    %p196 = por %p194, %p195
    %p197 = scmp.le.s32.totalorder 1, %s11
    %p198 = scmp.lt.s32.totalorder %s11, 9
    %p199 = pnand %p197, %p198
    %p200 = pneg %p199
    // Predicated region
    $region9: #{tpu_custom_call.1} parent=5 // pred_check
      _
    $region10: #{tpu_custom_call.1} parent=5 // pred_check_branch
      %202 = sbr.rel (%p199) target = $region12
    $region11: #{tpu_custom_call.1} parent=5 // pred_region
      %s203 = ssub.s32 %s11, 1
      // Predicated region
      $region13: #{tpu_custom_call.1} parent=11 // pred_check
        %p204 = pneg %p140
      $region14: #{tpu_custom_call.1} parent=11 // pred_check_branch
        %206 = sbr.rel (%p204) target = $region16
      $region15: #{tpu_custom_call.1} parent=11 // pred_region
        _
      $region16: #{tpu_custom_call.1} parent=11 // pred_fallthru
        _
      // Predicated region
      $region17: #{tpu_custom_call.1} parent=11 // pred_check
        %p207 = pneg %p161
      $region18: #{tpu_custom_call.1} parent=11 // pred_check_branch
        %209 = sbr.rel (%p207) target = $region20
      $region19: #{tpu_custom_call.1} parent=11 // pred_region
        _
      $region20: #{tpu_custom_call.1} parent=11 // pred_fallthru
        _
    $region12: #{tpu_custom_call.1} parent=5 // pred_fallthru
      _
    %p210 = scmp.lt.s32.totalorder %s11, 8
    // Predicated region
    $region21: #{tpu_custom_call.1} parent=5 // pred_check
      %p211 = pneg %p210
    $region22: #{tpu_custom_call.1} parent=5 // pred_check_branch
      %213 = sbr.rel (%p211) target = $region24
    $region23: #{tpu_custom_call.1} parent=5 // pred_region
      // Predicated region
      $region25: #{tpu_custom_call.1} parent=23 // pred_check
        %p214 = pneg %p45
      $region26: #{tpu_custom_call.1} parent=23 // pred_check_branch
        %216 = sbr.rel (%p214) target = $region28
      $region27: #{tpu_custom_call.1} parent=23 // pred_region
        %p217 = scmp.lt.s32.totalorder %s18, 1
        %s218 = scalar_select %p217, %s18, 1
        %p219 = scmp.lt.s32.totalorder %s19, 3
        %s220 = scalar_select %p219, %s19, 3
        %s221 = smul.addr %s218, 4
        %s222 = sadd.s32 %s220, %s221
        %s223 = smul.addr %s222, 8
        %s224 = scalar_lea.vmem %s0, %s223
      $region28: #{tpu_custom_call.1} parent=23 // pred_fallthru
        _
      // Predicated region
      $region29: #{tpu_custom_call.1} parent=23 // pred_check
        %p225 = pneg %p79
      $region30: #{tpu_custom_call.1} parent=23 // pred_check_branch
        %227 = sbr.rel (%p225) target = $region32
      $region31: #{tpu_custom_call.1} parent=23 // pred_region
        %s228 = ssub.s32 %s19, 1
        %p229 = scmp.gt.s32.totalorder %s228, 0
        %s230 = scalar_select %p229, %s228, 0
        %p231 = scmp.lt.s32.totalorder %s18, 1
        %s232 = scalar_select %p231, %s18, 1
        %p233 = scmp.lt.s32.totalorder %s230, 3
        %s234 = scalar_select %p233, %s230, 3
        %s235 = smul.addr %s232, 4
        %s236 = sadd.s32 %s234, %s235
        %s237 = smul.addr %s236, 8
        %s238 = scalar_lea.vmem %s1, %s237
        %s239 = ssub.s32 %s19, 1
        %p240 = scmp.gt.s32.totalorder %s239, 0
        %s241 = scalar_select %p240, %s239, 0
      $region32: #{tpu_custom_call.1} parent=23 // pred_fallthru
        _
      // Predicated region
      $region33: #{tpu_custom_call.1} parent=23 // pred_check
        %p242 = pneg %p113
      $region34: #{tpu_custom_call.1} parent=23 // pred_check_branch
        %244 = sbr.rel (%p242) target = $region36
      $region35: #{tpu_custom_call.1} parent=23 // pred_region
        %s245 = sadd.s32 %s19, 1
        %p246 = scmp.lt.s32.totalorder %s245, 3
        %s247 = scalar_select %p246, %s245, 3
        %p248 = scmp.lt.s32.totalorder %s18, 1
        %s249 = scalar_select %p248, %s18, 1
        %p250 = scmp.lt.s32.totalorder %s247, 3
        %s251 = scalar_select %p250, %s247, 3
        %s252 = smul.addr %s249, 4
        %s253 = sadd.s32 %s251, %s252
        %s254 = smul.addr %s253, 8
        %s255 = scalar_lea.vmem %s2, %s254
        %s256 = sadd.s32 %s19, 1
        %p257 = scmp.lt.s32.totalorder %s256, 3
        %s258 = scalar_select %p257, %s256, 3
      $region36: #{tpu_custom_call.1} parent=23 // pred_fallthru
        _
    $region24: #{tpu_custom_call.1} parent=5 // pred_fallthru
      _
    %p259 = scmp.le.s32.totalorder 1, %s11
    %p260 = scmp.lt.s32.totalorder %s11, 9
    %p261 = pnand %p259, %p260
    %p262 = pneg %p261
    // Predicated region
    $region37: #{tpu_custom_call.1} parent=5 // pred_check
      _
    $region38: #{tpu_custom_call.1} parent=5 // pred_check_branch
      %264 = sbr.rel (%p261) target = $region40
    $region39: #{tpu_custom_call.1} parent=5 // pred_region
      %s265 = ssub.s32 %s11, 1
      %p266 = scmp.lt.s32.totalorder %s20, 1
      %s267 = scalar_select %p266, %s20, 1
      %p268 = scmp.lt.s32.totalorder %s21, 3
      %s269 = scalar_select %p268, %s21, 3
      %s270 = smul.addr %s267, 4
      %s271 = sadd.s32 %s269, %s270
      %s272 = smul.addr %s271, 8
      %s273 = scalar_lea.vmem %s0, %s272
      %p274 = pneg %p51
      %p275 = pneg %p48
      %s276 = ssub.s32 %s21, 1
      %p277 = scmp.gt.s32.totalorder %s276, 0
      %s278 = scalar_select %p277, %s276, 0
      %p279 = scmp.lt.s32.totalorder %s20, 1
      %s280 = scalar_select %p279, %s20, 1
      %p281 = scmp.lt.s32.totalorder %s278, 3
      %s282 = scalar_select %p281, %s278, 3
      %s283 = smul.addr %s280, 4
      %s284 = sadd.s32 %s282, %s283
      %s285 = smul.addr %s284, 8
      %s286 = scalar_lea.vmem %s1, %s285
      %p287 = pneg %p85
      %p288 = pneg %p82
      %s289 = sadd.s32 %s21, 1
      %p290 = scmp.lt.s32.totalorder %s289, 3
      %s291 = scalar_select %p290, %s289, 3
      %p292 = scmp.lt.s32.totalorder %s20, 1
      %s293 = scalar_select %p292, %s20, 1
      %p294 = scmp.lt.s32.totalorder %s291, 3
      %s295 = scalar_select %p294, %s291, 3
      %s296 = smul.addr %s293, 4
      %s297 = sadd.s32 %s295, %s296
      %s298 = smul.addr %s297, 8
      %s299 = scalar_lea.vmem %s2, %s298
      %p300 = pneg %p119
      %p301 = pneg %p116
      %p302 = pneg %p140
      %p303 = pneg %p137
      %p304 = pneg %p161
      %p305 = pneg %p158
      %p306 = pneg %p189
      %p307 = pneg %p186
      %p308 = scmp.lt.s32.totalorder %s20, 1
      %s309 = scalar_select %p308, %s20, 1
      %p310 = scmp.lt.s32.totalorder %s21, 3
      %s311 = scalar_select %p310, %s21, 3
      %s312 = smul.addr %s309, 4
      %s313 = sadd.s32 %s311, %s312
      %s314 = smul.addr %s313, 8
      %s315 = scalar_lea.vmem %s5, %s314
      %p316 = scmp.lt.s32.totalorder %s20, 1
      %s317 = scalar_select %p316, %s20, 1
      %p318 = scmp.lt.s32.totalorder %s21, 3
      %s319 = scalar_select %p318, %s21, 3
      %s320 = smul.addr %s317, 4
      %s321 = sadd.s32 %s319, %s320
      %s322 = smul.addr %s321, 8
      %s323 = scalar_lea.vmem %s0, %s322
      %s324 = ssub.s32 %s21, 1
      %p325 = scmp.gt.s32.totalorder %s324, 0
      %s326 = scalar_select %p325, %s324, 0
      %p327 = scmp.lt.s32.totalorder %s20, 1
      %s328 = scalar_select %p327, %s20, 1
      %p329 = scmp.lt.s32.totalorder %s326, 3
      %s330 = scalar_select %p329, %s326, 3
      %s331 = smul.addr %s328, 4
      %s332 = sadd.s32 %s330, %s331
      %s333 = smul.addr %s332, 8
      %s334 = scalar_lea.vmem %s1, %s333
      %s335 = ssub.s32 %s21, 1
      %p336 = scmp.gt.s32.totalorder %s335, 0
      %s337 = scalar_select %p336, %s335, 0
      %s338 = sadd.s32 %s21, 1
      %p339 = scmp.lt.s32.totalorder %s338, 3
      %s340 = scalar_select %p339, %s338, 3
      %p341 = scmp.lt.s32.totalorder %s20, 1
      %s342 = scalar_select %p341, %s20, 1
      %p343 = scmp.lt.s32.totalorder %s340, 3
      %s344 = scalar_select %p343, %s340, 3
      %s345 = smul.addr %s342, 4
      %s346 = sadd.s32 %s344, %s345
      %s347 = smul.addr %s346, 8
      %s348 = scalar_lea.vmem %s2, %s347
      %s349 = sadd.s32 %s21, 1
      %p350 = scmp.lt.s32.totalorder %s349, 3
      %s351 = scalar_select %p350, %s349, 3
      %p352 = scmp.lt.s32.totalorder %s20, 1
      %s353 = scalar_select %p352, %s20, 1
      %p354 = scmp.lt.s32.totalorder %s21, 3
      %s355 = scalar_select %p354, %s21, 3
      %s356 = smul.addr %s353, 4
      %s357 = sadd.s32 %s355, %s356
      %s358 = smul.addr %s357, 8
      %s359 = scalar_lea.vmem %s5, %s358
      %v360 = vld [vmem:[%s323] sm:$0xff]
      %p361 = scmp.gt.s32.totalorder %s21, 0
      %s362 = scalar_select %p361, 1, 0
      %s363 = scvt.s32.f32 %s362
      %p364 = scmp.lt.s32.totalorder %s21, 3
      %s365 = scalar_select %p364, 1, 0
      %s366 = scvt.s32.f32 %s365
      %v367 = vld [vmem:[%s334 + $0x5] sm:$0x7]
      %v368 = vstv %s363
      %v369 = vmul.f32 %v367, %v368
      %v370 = vld [vmem:[%s348] sm:$0x7]
      %v371 = vstv %s366
      %v372 = vmul.f32 %v370, %v371
      %v374 = vrot.slane %v360, 5
      %v377 = vrot.slane %v372, 5
      %vm379 = vcmask 1042432
      %v380 = vsel %vm379, %v369, %v374
      %v381 = vsel %vm379, %v374, %v377
      %vm384 = vcmask 1046528
      %v385 = vrot.slane %v380, 1
      %v386 = vrot.slane %v381, 1
      %v387 = vsel %vm384, %v385, %v386
      %388 = vrot.lane.b32.xlu0 %v387, 8
      %v389 = vpop.permute.xlu0 %388
      %vm391 = vcmask 1045504
      %v392 = vrot.slane %v380, 2
      %v393 = vrot.slane %v381, 2
      %v394 = vsel %vm391, %v392, %v393
      %395 = vrot.lane.b32.xlu0 %v394, 16
      %v396 = vpop.permute.xlu0 %395
      %vm398 = vcmask 1044480
      %v399 = vrot.slane %v380, 3
      %v400 = vrot.slane %v381, 3
      %v401 = vsel %vm398, %v399, %v400
      %402 = vrot.lane.b32.xlu0 %v401, 24
      %v403 = vpop.permute.xlu0 %402
      %vm405 = vcmask 1043456
      %v406 = vrot.slane %v380, 4
      %v407 = vrot.slane %v381, 4
      %v408 = vsel %vm405, %v406, %v407
      %409 = vrot.lane.b32.xlu0 %v408, 32
      %v410 = vpop.permute.xlu0 %409
      %v412 = vrot.slane %v380, 5
      %v413 = vrot.slane %v381, 5
      %v414 = vsel %vm379, %v412, %v413
      %415 = vrot.lane.b32.xlu0 %v414, 40
      %v416 = vpop.permute.xlu0 %415
      %vm418 = vcmask 1041408
      %v419 = vrot.slane %v380, 6
      %v420 = vrot.slane %v381, 6
      %v421 = vsel %vm418, %v419, %v420
      %422 = vrot.lane.b32.xlu0 %v421, 48
      %v423 = vpop.permute.xlu0 %422
      %vm425 = vcmask 64512
      %v426 = vsel %vm425, %v380, %v389
      %vm427 = vcmask 130048
      %v428 = vsel %vm427, %v426, %v396
      %vm429 = vcmask 195584
      %v430 = vsel %vm429, %v428, %v403
      %vm431 = vcmask 261120
      %v432 = vsel %vm431, %v430, %v410
      %vm433 = vcmask 326656
      %v434 = vsel %vm433, %v432, %v416
      %vm435 = vcmask 392192
      %v436 = vsel %vm435, %v434, %v423
      %v437 = vld [vmem:[%s3] sm:$0xff]
      %v438 = vld [vmem:[%s3 + $0x8] sm:$0xff]
      %v439 = vld [vmem:[%s3 + $0x10] sm:$0xff]
      %v440 = vld [vmem:[%s3 + $0x18] sm:$0xff]
      %v441 = vld [vmem:[%s3 + $0x20] sm:$0xff]
      %v442 = vld [vmem:[%s3 + $0x28] sm:$0xff]
      %v443 = vld [vmem:[%s3 + $0x30] sm:$0xff]
      %v444 = vld [vmem:[%s4] sm:$0x1]
      %v446 = vlaneseq
      %v447 = vshrl.u32 %v446, 7
      %v448 = vsub.s32 0, %v447
      %v449 = vrot.slane %v444, %v448
      %vm451 = vcmask 457728
      %v453 = vsel %vm451, %v436, 0
      %455 = vmatprep.subr.mxu0 0.0
      %456 = vmatpush1.msra.mxu0 0.0
      %457 = vmatprep.subr.mxu0 0.0
      %458 = vmatpush1.msra.mxu0 0.0
      %459 = vmatprep.subr.mxu0 0.0
      %460 = vmatpush1.msra.mxu0 0.0
      %461 = vmatprep.subr.mxu0 0.0
      %462 = vmatpush1.msra.mxu0 0.0
      %463 = vmatprep.subr.mxu0 0.0
      %464 = vmatpush1.msra.mxu0 0.0
      %465 = vmatprep.subr.mxu0 0.0
      %466 = vmatpush1.msra.mxu0 0.0
      %467 = vmatprep.subr.mxu0 0.0
      %468 = vmatpush1.msra.mxu0 0.0
      %469 = vmatprep.subr.mxu0 0.0
      %470 = vmatpush1.msra.mxu0 0.0
      %471 = vmatprep.subr.mxu0 0.0
      %472 = vmatpush1.msra.mxu0 0.0
      %473 = vmatprep.subr.mxu0 0.0
      %474 = vmatpush1.msra.mxu0 %v443
      %475 = vmatprep.subr.mxu0 0.0
      %476 = vmatpush1.msra.mxu0 %v442
      %477 = vmatprep.subr.mxu0 0.0
      %478 = vmatpush1.msra.mxu0 %v441
      %479 = vmatprep.subr.mxu0 0.0
      %480 = vmatpush1.msra.mxu0 %v440
      %481 = vmatprep.subr.mxu0 0.0
      %482 = vmatpush1.msra.mxu0 %v439
      %483 = vmatprep.subr.mxu0 0.0
      %484 = vmatpush1.msra.mxu0 %v438
      %485 = vmatprep.subr.mxu0 0.0
      %486 = vmatpush1.msra.mxu0 %v437
      %487 = vmatprep.subr.mxu0 0.0
      %488 = vmatpush2.msra.mxu0 0.0
      %489 = vmatprep.subr.mxu0 0.0
      %490 = vmatpush2.msra.mxu0 0.0
      %491 = vmatprep.subr.mxu0 0.0
      %492 = vmatpush2.msra.mxu0 0.0
      %493 = vmatprep.subr.mxu0 0.0
      %494 = vmatpush2.msra.mxu0 0.0
      %495 = vmatprep.subr.mxu0 0.0
      %496 = vmatpush2.msra.mxu0 0.0
      %497 = vmatprep.subr.mxu0 0.0
      %498 = vmatpush2.msra.mxu0 0.0
      %499 = vmatprep.subr.mxu0 0.0
      %500 = vmatpush2.msra.mxu0 0.0
      %501 = vmatprep.subr.mxu0 0.0
      %502 = vmatpush2.msra.mxu0 0.0
      %503 = vmatprep.subr.mxu0 0.0
      %504 = vmatpush2.msra.mxu0 0.0
      %505 = vmatprep.subr.mxu0 0.0
      %506 = vmatpush2.msra.mxu0 0.0
      %507 = vmatprep.subr.mxu0 0.0
      %508 = vmatpush2.msra.mxu0 0.0
      %509 = vmatprep.subr.mxu0 0.0
      %510 = vmatpush2.msra.mxu0 0.0
      %511 = vmatprep.subr.mxu0 0.0
      %512 = vmatpush2.msra.mxu0 0.0
      %513 = vmatprep.subr.mxu0 0.0
      %514 = vmatpush2.msra.mxu0 0.0
      %515 = vmatprep.subr.mxu0 0.0
      %516 = vmatpush2.msra.mxu0 0.0
      %517 = vmatprep.subr.mxu0 0.0
      %518 = vmatpush2.msra.mxu0 0.0
      %519 = vmatprep.mubr.f32.mxu0 0.0
      %520 = vmatmul.mubr.f32.gmra.mxu0 %v453
      %v521 = vpop.f32.mrf.mxu0
      %v522 = vadd.f32 %v449, %v521
      %v523 = vpop.f32.mrf.mxu0
      %524 = vdwg.mxu0
      %v525 = vmax.f32 %v522, 0.0
      %526 = vst.msk [vmem:[%s359] sm:$0xff] %vm425, %v525
      %p527 = scmp.lt.s32.totalorder %s20, 1
      %s528 = scalar_select %p527, %s20, 1
      %p529 = scmp.lt.s32.totalorder %s21, 3
      %s530 = scalar_select %p529, %s21, 3
      %s531 = smul.addr %s528, 4
      %s532 = sadd.s32 %s530, %s531
      %s533 = smul.addr %s532, 8
      %s534 = scalar_lea.vmem %s5, %s533
      // Predicated region
      $region41: #{tpu_custom_call.1} parent=39 // pred_check
        %p535 = pneg %p186
      $region42: #{tpu_custom_call.1} parent=39 // pred_check_branch
        %537 = sbr.rel (%p535) target = $region44
      $region43: #{tpu_custom_call.1} parent=39 // pred_region
        _
      $region44: #{tpu_custom_call.1} parent=39 // pred_fallthru
        _
    $region40: #{tpu_custom_call.1} parent=5 // pred_fallthru
      _
    %p538 = scmp.le.s32.totalorder 2, %s11
    // Predicated region
    $region45: #{tpu_custom_call.1} parent=5 // pred_check
      %p539 = pneg %p538
    $region46: #{tpu_custom_call.1} parent=5 // pred_check_branch
      %541 = sbr.rel (%p539) target = $region48
    $region47: #{tpu_custom_call.1} parent=5 // pred_region
      %s542 = ssub.s32 %s11, 2
      // Predicated region
      $region49: #{tpu_custom_call.1} parent=47 // pred_check
        %p543 = pneg %p192
      $region50: #{tpu_custom_call.1} parent=47 // pred_check_branch
        %545 = sbr.rel (%p543) target = $region52
      $region51: #{tpu_custom_call.1} parent=47 // pred_region
        %p546 = scmp.lt.s32.totalorder %s22, 1
        %s547 = scalar_select %p546, %s22, 1
        %p548 = scmp.lt.s32.totalorder %s23, 3
        %s549 = scalar_select %p548, %s23, 3
        %s550 = smul.addr %s547, 4
        %s551 = sadd.s32 %s549, %s550
        %s552 = smul.addr %s551, 8
        %s553 = scalar_lea.vmem %s5, %s552
      $region52: #{tpu_custom_call.1} parent=47 // pred_fallthru
        _
    $region48: #{tpu_custom_call.1} parent=5 // pred_fallthru
      _
  $region6: #{tpu_custom_call.1} parent=0 // loop_footer
    %s15 = sadd.s32 1, %s11
  $region7: #{tpu_custom_call.1} parent=0 // loop_footer_branch
    %10 = sbr.rel target = $region3
  $region8: #{tpu_custom_call.1} parent=0 // loop_exit
    _

</llo_original>
